<compile_context>
chip_gen: v7x
topology: tpu7x:2x2x1
jax: 0.10.0
libtpu: 0.0.40
codegen_flags: <defaults>
</compile_context>

<pallas_src>
import functools
import math

import jax
import jax.numpy as jnp
from jax.experimental import pallas as pl
from jax.experimental.pallas import tpu as pltpu


def _sinusoidal_kernel(freqs_ref, time_ref, out_ref, *, half_dim: int):
    # freqs_ref: (1, half_dim) f32   time_ref: (TB, 1) f32   out_ref: (TB, dim)
    arg = time_ref[...] * freqs_ref[...]               # (TB, half_dim), f32
    out_ref[:, :half_dim] = jnp.sin(arg).astype(out_ref.dtype)
    out_ref[:, half_dim:] = jnp.cos(arg).astype(out_ref.dtype)


def sinusoidal_position_embeddings(
    time: jax.Array,
    dim: int,
    *,
    block_b: int = 512,
    out_dtype=jnp.float32,
) -> jax.Array:
    """Pallas TPU implementation of SinusoidalPositionEmbeddings.forward."""
    assert time.ndim == 1, "time must be a 1-D tensor of timesteps"
    assert dim % 2 == 0, "dim must be even"
    assert dim >= 4, "dim must be >= 4 (avoids divide-by-zero in the scale)"

    half_dim = dim // 2
    b = time.shape[0]

    # Hoisted constant: frequency row computed once, outside the kernel.
    log_scale = math.log(10000.0) / (half_dim - 1)
    freqs = jnp.exp(
        jnp.arange(half_dim, dtype=jnp.float32) * (-log_scale)
    ).reshape(1, half_dim)

    # Batch tiling: TB rows per grid step (TB is a multiple of 8 once b > block_b,
    # otherwise the block spans the full array, which is always legal).
    tb = b if b <= block_b else block_b
    n_blocks = pl.cdiv(b, tb)
    b_pad = n_blocks * tb

    time2d = time.astype(jnp.float32).reshape(b, 1)
    if b_pad != b:
        time2d = jnp.pad(time2d, ((0, b_pad - b), (0, 0)))

    kernel = functools.partial(_sinusoidal_kernel, half_dim=half_dim)

    out = pl.pallas_call(
        kernel,
        out_shape=jax.ShapeDtypeStruct((b_pad, dim), out_dtype),
        grid_spec=pltpu.PrefetchScalarGridSpec(
            num_scalar_prefetch=0,
            grid=(n_blocks,),
            in_specs=[
                pl.BlockSpec((1, half_dim), lambda i: (0, 0)),  # freqs (broadcast)
                pl.BlockSpec((tb, 1), lambda i: (i, 0)),        # timestep rows
            ],
            out_specs=pl.BlockSpec((tb, dim), lambda i: (i, 0)),
        ),
        compiler_params=pltpu.CompilerParams(
            dimension_semantics=("parallel",),
        ),
    )(freqs, time2d)

    return out[:b] if b_pad != b else out


def _reference(time: jax.Array, dim: int) -> jax.Array:
    # Pure-JAX mirror of the PyTorch forward.
    half_dim = dim // 2
    emb = math.log(10000.0) / (half_dim - 1)
    emb = jnp.exp(jnp.arange(half_dim, dtype=jnp.float32) * -emb)
    emb = time.astype(jnp.float32)[:, None] * emb[None, :]
    return jnp.concatenate([jnp.sin(emb), jnp.cos(emb)], axis=-1)


if __name__ == "__main__":
    key = jax.random.PRNGKey(0)
    batch = 16
    dim = 32  # embedding dimension (the module's `dim`)

    # Diffusion-style integer timesteps cast to float.
    time = jax.random.randint(key, (batch,), 0, 1000).astype(jnp.float32)

    # block_b=8 exercises the tiled / pipelined path (grid = (2,)) even at
    # this toy size; default block_b=512 is the large-batch configuration.
    out = sinusoidal_position_embeddings(time, dim, block_b=8)
    out = jax.block_until_ready(out)

    ref = _reference(time, dim)
    assert out.shape == (batch, dim), out.shape
    assert out.dtype == jnp.float32

    # sin/cos arguments reach ~1e3; a few argument-ulps of range-reduction
    # difference between backends gives up to ~1e-4 output difference, so
    # compare at 1e-3 (real bugs would show as O(1) errors).
    err = float(jnp.max(jnp.abs(out - ref)))
    assert err < 1e-3, f"mismatch vs reference, max abs err = {err}"

    print("KERNEL_OK")
</pallas_src>

<mosaic_0001>
module attributes {stable_mosaic.version = 11 : i64} {
  func.func @_sinusoidal_kernel(%arg0: i32, %arg1: memref<1x16xf32, #tpu.memory_space<vmem>>, %arg2: memref<8x1xf32, #tpu.memory_space<vmem>>, %arg3: memref<8x32xf32, #tpu.memory_space<vmem>>) attributes {dimension_semantics = [#tpu.dimension_semantics<parallel>], iteration_bounds = array<i64: 2>, scalar_prefetch = 0 : i64, scratch_operands = 0 : i64, tpu.core_type = #tpu.core_type<tc>, window_params = [{pipeline_mode = #tpu.pipeline_mode<synchronous>, transform_indices = @transform_0, window_bounds = array<i64: 1, 16>}, {transform_indices = @transform_1, window_bounds = array<i64: 8, 1>}, {transform_indices = @transform_2, window_bounds = array<i64: 8, 32>}]} {
    %c0 = arith.constant 0 : index
    %c0_0 = arith.constant 0 : index
    %0 = vector.load %arg2[%c0, %c0_0] : memref<8x1xf32, #tpu.memory_space<vmem>>, vector<8x1xf32>
    %c0_1 = arith.constant 0 : index
    %c0_2 = arith.constant 0 : index
    %1 = vector.load %arg1[%c0_1, %c0_2] : memref<1x16xf32, #tpu.memory_space<vmem>>, vector<1x16xf32>
    %2 = vector.broadcast %0 : vector<8x1xf32> to vector<8x16xf32>
    %3 = vector.broadcast %1 : vector<1x16xf32> to vector<8x16xf32>
    %4 = arith.mulf %2, %3 : vector<8x16xf32>
    %5 = math.sin %4 : vector<8x16xf32>
    %c0_3 = arith.constant 0 : index
    %c0_4 = arith.constant 0 : index
    %6 = vector.load %arg3[%c0_3, %c0_4] : memref<8x32xf32, #tpu.memory_space<vmem>>, vector<8x16xf32>
    tpu.vector_store %arg3[%c0_3, %c0_4], %5 {strides = array<i32>} : memref<8x32xf32, #tpu.memory_space<vmem>>, vector<8x16xf32>,
    %7 = math.cos %4 : vector<8x16xf32>
    %c0_5 = arith.constant 0 : index
    %c16 = arith.constant 16 : index
    %8 = vector.load %arg3[%c0_5, %c16] : memref<8x32xf32, #tpu.memory_space<vmem>>, vector<8x16xf32>
    tpu.vector_store %arg3[%c0_5, %c16], %7 {strides = array<i32>} : memref<8x32xf32, #tpu.memory_space<vmem>>, vector<8x16xf32>,
    return
  }
  func.func @transform_0(%arg0: i32) -> (i32, i32) {
    %c0_i32 = arith.constant 0 : i32
    %c0_i32_0 = arith.constant 0 : i32
    %c0_i32_1 = arith.constant 0 : i32
    return %c0_i32, %c0_i32_0 : i32, i32
  }
  func.func @transform_1(%arg0: i32) -> (i32, i32) {
    %c0_i32 = arith.constant 0 : i32
    %c0_i32_0 = arith.constant 0 : i32
    return %arg0, %c0_i32 : i32, i32
  }
  func.func @transform_2(%arg0: i32) -> (i32, i32) {
    %c0_i32 = arith.constant 0 : i32
    %c0_i32_0 = arith.constant 0 : i32
    return %arg0, %c0_i32 : i32, i32
  }
}

</mosaic_0001>

<llo_original>
// kernel: tpu_custom_call.1
$region0: #{tpu_custom_call.1}
  #allocation0 [shape = 'u32[]', space=smem, size = 0x4, offset = 0x4, fixed_abs, tag = 'smem constant byte address 0x4 - core index']
  #allocation1 [shape = 'u32[144,128]{1,0:T(1,128)}', space=vmem, size = 0x12000, scoped, tag = 'internal scratch']
  %s0 = inlined_call_operand.vmem [shape: f32[1,16], index: 0, kind: input, shape index: {}]
  %s1 = inlined_call_operand.vmem [shape: f32[16,1], index: 1, kind: input, shape index: {}]
  %s2 = inlined_call_operand.hbm [shape: f32[16,32], index: 2, kind: output, shape index: {}]
  %s3 = sld [smem:[#allocation0]]
  $region41: #{tpu_custom_call.1} parent=0
    _
  %s5 = ssub.s32 1, %s3
  %s6 = scalar_select 0, %s5, %s3
  $region1: #{tpu_custom_call.1} parent=0
    #allocation2 [shape = 'u8[8192]{0}', space=vmem, size = 0x2000, scoped, tag = 'output window, operand 0']
    #allocation3 [shape = 's32[2]{0}', space=sflag, size = 0x8, scoped, tag = 'scoped memory for tpu_custom_call.1']
    %7 = vsyncpa [#allocation3], 0
    %s8 = scalar_lea.sflag [#allocation3], 1
    %9 = vsyncpa %s8, 0
    loop: start=0, step=1, limit=4
    $region2: #{tpu_custom_call.1} parent=1 // loop_pre_header
      _
    $region3: #{tpu_custom_call.1} parent=1 // loop_header
      %s11 = sphi 0, %s15
      %p12 = scmp.ge.s32.totalorder %s11, 4
      %s19 = sphi 0, %s19
      %s21 = sphi 0, %s19
      %s22 = sphi 0, %s21
      %s36 = sphi 0, %s22
      %s42 = sphi 0, %s44
      %s45 = sphi 0, %s42
      %s46 = sphi 0, %s45
      %s62 = sphi 0, %s46
      %s68 = sphi 0, %s70
      %s71 = sphi 0, %s68
      %s72 = sphi 0, %s71
      %s88 = sphi 0, %s72
    $region4: #{tpu_custom_call.1} parent=1 // loop_header_branch
      %14 = sbr.rel (%p12) target = $region8
    $region5: #{tpu_custom_call.1} parent=1 // loop_body
      %s16 = ssub.s32 %s11, 1
      %s17 = ssub.s32 %s11, 2
      %s18 = sadd.s32 %s11, 1
      %s20 = sadd.s32 %s19, 1
      %p23 = scmp.eq.s32.totalorder %s11, 1
      %p24 = scmp.ne.s32.totalorder %s19, %s21
      %p25 = scmp.eq.s32.totalorder %s11, 0
      %p26 = por %p24, %p25
      %p27 = scmp.ne.s32.totalorder %s19, %s21
      %p28 = scmp.eq.s32.totalorder %s16, 1
      %p29 = por %p27, %p28
      %p30 = scmp.ne.s32.totalorder %s21, %s22
      %p31 = scmp.eq.s32.totalorder %s16, 0
      %p32 = por %p30, %p31
      %p33 = scmp.ne.s32.totalorder %s21, %s22
      %p34 = scmp.eq.s32.totalorder %s17, 1
      %p35 = por %p33, %p34
      %p37 = scmp.ne.s32.totalorder %s22, %s36
      %p38 = scmp.eq.s32.totalorder %s17, 0
      %p39 = por %p37, %p38
      %s40 = ssub.s32 %s11, %s18
      %p41 = scmp.eq.s32.totalorder %s40, 0
      %s43 = sadd.s32 %s42, 1
      %s44 = scalar_select %p41, %s42, %s43
      %p47 = pneg %p41
      %p48 = scmp.eq.s32.totalorder %s11, 1
      %p49 = por %p47, %p48
      %p50 = scmp.ne.s32.totalorder %s42, %s45
      %p51 = scmp.eq.s32.totalorder %s11, 0
      %p52 = por %p50, %p51
      %p53 = scmp.ne.s32.totalorder %s42, %s45
      %p54 = scmp.eq.s32.totalorder %s16, 1
      %p55 = por %p53, %p54
      %p56 = scmp.ne.s32.totalorder %s45, %s46
      %p57 = scmp.eq.s32.totalorder %s16, 0
      %p58 = por %p56, %p57
      %p59 = scmp.ne.s32.totalorder %s45, %s46
      %p60 = scmp.eq.s32.totalorder %s17, 1
      %p61 = por %p59, %p60
      %p63 = scmp.ne.s32.totalorder %s46, %s62
      %p64 = scmp.eq.s32.totalorder %s17, 0
      %p65 = por %p63, %p64
      %s66 = ssub.s32 %s11, %s18
      %p67 = scmp.eq.s32.totalorder %s66, 0
      %s69 = sadd.s32 %s68, 1
      %s70 = scalar_select %p67, %s68, %s69
      %p73 = pneg %p67
      %p74 = scmp.eq.s32.totalorder %s11, 1
      %p75 = por %p73, %p74
      %p76 = scmp.ne.s32.totalorder %s68, %s71
      %p77 = scmp.eq.s32.totalorder %s11, 0
      %p78 = por %p76, %p77
      %p79 = scmp.ne.s32.totalorder %s68, %s71
      %p80 = scmp.eq.s32.totalorder %s16, 1
      %p81 = por %p79, %p80
      %p82 = scmp.ne.s32.totalorder %s71, %s72
      %p83 = scmp.eq.s32.totalorder %s16, 0
      %p84 = por %p82, %p83
      %p85 = scmp.ne.s32.totalorder %s71, %s72
      %p86 = scmp.eq.s32.totalorder %s17, 1
      %p87 = por %p85, %p86
      %p89 = scmp.ne.s32.totalorder %s72, %s88
      %p90 = scmp.eq.s32.totalorder %s17, 0
      %p91 = por %p89, %p90
      %p92 = scmp.le.s32.totalorder 1, %s11
      %p93 = scmp.lt.s32.totalorder %s11, 3
      %p94 = pnand %p92, %p93
      %p95 = pneg %p94
      // Predicated region
      $region9: #{tpu_custom_call.1} parent=5 // pred_check
        _
      $region10: #{tpu_custom_call.1} parent=5 // pred_check_branch
        %97 = sbr.rel (%p94) target = $region12
      $region11: #{tpu_custom_call.1} parent=5 // pred_region
        %s98 = ssub.s32 %s11, 1
        // Predicated region
        $region13: #{tpu_custom_call.1} parent=11 // pred_check
          %p99 = pneg %p32
        $region14: #{tpu_custom_call.1} parent=11 // pred_check_branch
          %101 = sbr.rel (%p99) target = $region16
        $region15: #{tpu_custom_call.1} parent=11 // pred_region
          _
        $region16: #{tpu_custom_call.1} parent=11 // pred_fallthru
          _
      $region12: #{tpu_custom_call.1} parent=5 // pred_fallthru
        _
      %p102 = scmp.lt.s32.totalorder %s11, 2
      // Predicated region
      $region17: #{tpu_custom_call.1} parent=5 // pred_check
        %p103 = pneg %p102
      $region18: #{tpu_custom_call.1} parent=5 // pred_check_branch
        %105 = sbr.rel (%p103) target = $region20
      $region19: #{tpu_custom_call.1} parent=5 // pred_region
        // Predicated region
        $region21: #{tpu_custom_call.1} parent=19 // pred_check
          %p106 = pneg %p52
        $region22: #{tpu_custom_call.1} parent=19 // pred_check_branch
          %108 = sbr.rel (%p106) target = $region24
        $region23: #{tpu_custom_call.1} parent=19 // pred_region
          %p109 = scmp.lt.s32.totalorder %s11, 1
          %s110 = scalar_select %p109, %s11, 1
          %s111 = smul.addr %s110, 8
          %s112 = scalar_lea.vmem %s1, %s111
        $region24: #{tpu_custom_call.1} parent=19 // pred_fallthru
          _
      $region20: #{tpu_custom_call.1} parent=5 // pred_fallthru
        _
      %p113 = scmp.le.s32.totalorder 1, %s11
      %p114 = scmp.lt.s32.totalorder %s11, 3
      %p115 = pnand %p113, %p114
      %p116 = pneg %p115
      // Predicated region
      $region25: #{tpu_custom_call.1} parent=5 // pred_check
        _
      $region26: #{tpu_custom_call.1} parent=5 // pred_check_branch
        %118 = sbr.rel (%p115) target = $region28
      $region27: #{tpu_custom_call.1} parent=5 // pred_region
        %s119 = ssub.s32 %s11, 1
        %p120 = pneg %p32
        %p121 = pneg %p29
        %p122 = scmp.lt.s32.totalorder %s16, 1
        %s123 = scalar_select %p122, %s16, 1
        %s124 = smul.addr %s123, 8
        %s125 = scalar_lea.vmem %s1, %s124
        %p126 = pneg %p58
        %p127 = pneg %p55
        %p128 = pneg %p84
        %p129 = pneg %p81
        %s130 = sand.u32 %s71, 1
        %s131 = scalar_lea.sflag [#allocation3], %s130
        %s132 = sand.u32 %s71, 1
        %s133 = smul.addr %s132, 8
        %s134 = scalar_lea.vmem [#allocation2], %s133
        %p135 = scmp.lt.s32.totalorder %s16, 1
        %s136 = scalar_select %p135, %s16, 1
        %s137 = smul.addr %s136, 8
        %s138 = scalar_lea.vmem %s1, %s137
        %v139 = vld [vmem:[%s138] sm:$0xff]
        %v140 = vld [vmem:[%s0] sm:$0x1]
        %142 = vset.pattern.permute.xlu0 0
        %143 = vperm.xlu0 %142, %v139
        %v144 = vpop.permute.xlu0 %143
        %v147 = vlaneseq
        %v148 = vshrl.u32 %v147, 7
        %v149 = vsub.s32 0, %v148
        %v150 = vrot.slane %v140, %v149
        %v152 = vmul.f32 %v144, %v150
        %v153 = vand.u32 2147483647, %v152
        %vm154 = vcmp.le.f32.partialorder %v153, 0.7853982
        %vm155 = vcmp.lt.s32.totalorder %v152, 0
        %v156 = vand.u32 %v152, 2139095040
        %v157 = vshrl.u32 %v156, 23
        %v158 = vsub.s32 %v157, 127
        %v159 = vand.u32 2147483647, %v152
        %v160 = vand.u32 %v159, 8388607
        %v161 = vor.u32 %v160, 8388608
        %v162 = vsub.s32 0, %v161
        %v163 = vadd.s32 %v158, 1
        %vm164 = vcmp.gt.s32.totalorder %v163, 0
        %v165 = vsel %vm164, %v163, 0
        %v166 = vshrl.u32 %v165, 5
        %v167 = vand.u32 %v165, 31
        %v168 = vsub.s32 32, %v167
        %v169 = vshrl.u32 683565275, %v168
        %v170 = vshll.u32 683565275, %v167
        %v171 = vshrl.u32 2475754826, %v168
        %v172 = vor.u32 %v170, %v171
        %v173 = vshll.u32 2475754826, %v167
        %v174 = vshrl.u32 2131351028, %v168
        %v175 = vor.u32 %v173, %v174
        %v176 = vshll.u32 2131351028, %v167
        %v177 = vshrl.u32 2102212464, %v168
        %v178 = vor.u32 %v176, %v177
        %v179 = vshll.u32 2102212464, %v167
        %v180 = vshrl.u32 920167782, %v168
        %v181 = vor.u32 %v179, %v180
        %v182 = vshll.u32 920167782, %v167
        %v183 = vshrl.u32 1326507024, %v168
        %v184 = vor.u32 %v182, %v183
        %vm185 = vcmp.lt.s32.totalorder %v166, 1
        %vm186 = vcmp.lt.s32.totalorder %v166, 2
        %vm187 = vcmp.lt.s32.totalorder %v166, 3
        %vm188 = vcmp.lt.s32.totalorder %v166, 4
        %v189 = vsel %vm185, %v169, %v172
        %v190 = vsel %vm188, %v178, 2102212464
        %v191 = vsel %vm187, %v175, %v190
        %v192 = vsel %vm186, %v189, %v191
        %v193 = vsel %vm185, %v172, %v175
        %v194 = vsel %vm188, %v181, 920167782
        %v195 = vsel %vm187, %v178, %v194
        %v196 = vsel %vm186, %v193, %v195
        %v197 = vsel %vm185, %v175, %v178
        %v198 = vsel %vm188, %v184, 1326507024
        %v199 = vsel %vm187, %v181, %v198
        %v200 = vsel %vm186, %v197, %v199
        %v201 = vshll.u32 %v161, 8
        %v202 = vmul.u32.u64.compose %v201, %v200
        %v203 = vextract.low.u32 %v202
        %v204 = vextract.high.u32 %v202
        %v205 = vmul.u32.u64.compose %v201, %v196
        %v206 = vextract.low.u32 %v205
        %v207 = vextract.high.u32 %v205
        %v208 = vmul.u32 %v201, %v192
        %v209 = vadd.s32 %v204, %v206
        %vm210 = vc.u32 %v204, %v206
        %v211 = vadd.s32 %v207, 1
        %v212 = vsel %vm210, %v211, %v207
        %v213 = vadd.s32 %v208, %v212
        %v214 = vadd.s32 %v213, 536870912
        %v215 = vshrl.u32 %v214, 30
        %v216 = vshll.u32 %v215, 30
        %v217 = vsub.s32 %v213, %v216
        %vm218 = vcmp.lt.s32.totalorder %v217, 0
        %v219 = vsub.s32 0, %v217
        %v220 = vsel %vm218, %v219, %v217
        %v221 = vclz %v220
        %v222 = vsub.s32 %v221, 2
        %vm223 = vcmp.gt.s32.totalorder 0, %v222
        %v224 = vsel %vm223, 0, %v222
        %v225 = vsub.s32 32, %v224
        %v226 = vshll.u32 %v217, %v224
        %v227 = vshrl.u32 %v209, %v225
        %v228 = vor.u32 %v226, %v227
        %v229 = vsub.s32 4294967266, %v224
        %v230 = vadd.s32 %v229, 127
        %v231 = vshll.u32 %v230, 23
        %v232 = vor.u32 4788187, %v231
        %v233 = vand.u32 2147483647, %v232
        %v235 = vcvt.s32.f32 %v228
        %v236 = vmul.f32 %v235, %v233
        %v237 = vxor.u32 %v236, 2147483648
        %v238 = vsel %vm155, %v237, %v236
        %v239 = vsub.s32 4, %v215
        %v240 = vsel %vm155, %v239, %v215
        %v241 = vsel %vm154, %v152, %v238
        %v242 = vsel %vm154, 0, %v240
        %v243 = vcosq.f32.pop %v241
        %v244 = vsinq.f32.pop %v241
        %vm245 = vweird.f32 %v152
        %v246 = vadd.s32 %v242, 3
        %v247 = vand.u32 %v246, 3
        %vm248 = vcmp.lt.s32.totalorder %v247, 2
        %vm249 = vcmp.eq.s32.totalorder %v247, 0
        %v250 = vxor.u32 %v244, 2147483648
        %v251 = vsel %vm249, %v243, %v250
        %vm252 = vcmp.eq.s32.totalorder %v247, 2
        %v253 = vxor.u32 %v243, 2147483648
        %v254 = vsel %vm252, %v253, %v244
        %v255 = vsel %vm248, %v251, %v254
        %v256 = vsel %vm245, nan, %v255
        %vm257 = vcmask 130048
        %258 = vst.msk [vmem:[%s134] sm:$0xff] %vm257, %v256
        %v259 = vand.u32 2147483647, %v152
        %vm260 = vcmp.le.f32.partialorder %v259, 0.7853982
        %vm261 = vcmp.lt.s32.totalorder %v152, 0
        %v262 = vand.u32 %v152, 2139095040
        %v263 = vshrl.u32 %v262, 23
        %v264 = vsub.s32 %v263, 127
        %v265 = vand.u32 2147483647, %v152
        %v266 = vand.u32 %v265, 8388607
        %v267 = vor.u32 %v266, 8388608
        %v268 = vsub.s32 0, %v267
        %v269 = vadd.s32 %v264, 1
        %vm270 = vcmp.gt.s32.totalorder %v269, 0
        %v271 = vsel %vm270, %v269, 0
        %v272 = vshrl.u32 %v271, 5
        %v273 = vand.u32 %v271, 31
        %v274 = vsub.s32 32, %v273
        %v275 = vshrl.u32 683565275, %v274
        %v276 = vshll.u32 683565275, %v273
        %v277 = vshrl.u32 2475754826, %v274
        %v278 = vor.u32 %v276, %v277
        %v279 = vshll.u32 2475754826, %v273
        %v280 = vshrl.u32 2131351028, %v274
        %v281 = vor.u32 %v279, %v280
        %v282 = vshll.u32 2131351028, %v273
        %v283 = vshrl.u32 2102212464, %v274
        %v284 = vor.u32 %v282, %v283
        %v285 = vshll.u32 2102212464, %v273
        %v286 = vshrl.u32 920167782, %v274
        %v287 = vor.u32 %v285, %v286
        %v288 = vshll.u32 920167782, %v273
        %v289 = vshrl.u32 1326507024, %v274
        %v290 = vor.u32 %v288, %v289
        %vm291 = vcmp.lt.s32.totalorder %v272, 1
        %vm292 = vcmp.lt.s32.totalorder %v272, 2
        %vm293 = vcmp.lt.s32.totalorder %v272, 3
        %vm294 = vcmp.lt.s32.totalorder %v272, 4
        %v295 = vsel %vm291, %v275, %v278
        %v296 = vsel %vm294, %v284, 2102212464
        %v297 = vsel %vm293, %v281, %v296
        %v298 = vsel %vm292, %v295, %v297
        %v299 = vsel %vm291, %v278, %v281
        %v300 = vsel %vm294, %v287, 920167782
        %v301 = vsel %vm293, %v284, %v300
        %v302 = vsel %vm292, %v299, %v301
        %v303 = vsel %vm291, %v281, %v284
        %v304 = vsel %vm294, %v290, 1326507024
        %v305 = vsel %vm293, %v287, %v304
        %v306 = vsel %vm292, %v303, %v305
        %v307 = vshll.u32 %v267, 8
        %v308 = vmul.u32.u64.compose %v307, %v306
        %v309 = vextract.low.u32 %v308
        %v310 = vextract.high.u32 %v308
        %v311 = vmul.u32.u64.compose %v307, %v302
        %v312 = vextract.low.u32 %v311
        %v313 = vextract.high.u32 %v311
        %v314 = vmul.u32 %v307, %v298
        %v315 = vadd.s32 %v310, %v312
        %vm316 = vc.u32 %v310, %v312
        %v317 = vadd.s32 %v313, 1
        %v318 = vsel %vm316, %v317, %v313
        %v319 = vadd.s32 %v314, %v318
        %v320 = vadd.s32 %v319, 536870912
        %v321 = vshrl.u32 %v320, 30
        %v322 = vshll.u32 %v321, 30
        %v323 = vsub.s32 %v319, %v322
        %vm324 = vcmp.lt.s32.totalorder %v323, 0
        %v325 = vsub.s32 0, %v323
        %v326 = vsel %vm324, %v325, %v323
        %v327 = vclz %v326
        %v328 = vsub.s32 %v327, 2
        %vm329 = vcmp.gt.s32.totalorder 0, %v328
        %v330 = vsel %vm329, 0, %v328
        %v331 = vsub.s32 32, %v330
        %v332 = vshll.u32 %v323, %v330
        %v333 = vshrl.u32 %v315, %v331
        %v334 = vor.u32 %v332, %v333
        %v335 = vsub.s32 4294967266, %v330
        %v336 = vadd.s32 %v335, 127
        %v337 = vshll.u32 %v336, 23
        %v338 = vor.u32 4788187, %v337
        %v339 = vand.u32 2147483647, %v338
        %v341 = vcvt.s32.f32 %v334
        %v342 = vmul.f32 %v341, %v339
        %v343 = vxor.u32 %v342, 2147483648
        %v344 = vsel %vm261, %v343, %v342
        %v345 = vsub.s32 4, %v321
        %v346 = vsel %vm261, %v345, %v321
        %v347 = vsel %vm260, %v152, %v344
        %v348 = vsel %vm260, 0, %v346
        %v349 = vcosq.f32.pop %v347
        %v350 = vsinq.f32.pop %v347
        %vm351 = vweird.f32 %v152
        %v352 = vand.u32 %v348, 3
        %vm353 = vcmp.lt.s32.totalorder %v352, 2
        %vm354 = vcmp.eq.s32.totalorder %v352, 0
        %v355 = vxor.u32 %v350, 2147483648
        %v356 = vsel %vm354, %v349, %v355
        %vm357 = vcmp.eq.s32.totalorder %v352, 2
        %v358 = vxor.u32 %v349, 2147483648
        %v359 = vsel %vm357, %v358, %v350
        %v360 = vsel %vm353, %v356, %v359
        %v361 = vsel %vm351, nan, %v360
        %363 = vrot.lane.b32.xlu0 %v361, 16
        %v364 = vpop.permute.xlu0 %363
        %vm366 = vcmask 261248
        %367 = vst.msk [vmem:[%s134] sm:$0xff] %vm366, %v364
        %s368 = sand.u32 %s71, 1
        %s369 = scalar_lea.sflag [#allocation3], %s368
        %s370 = sand.u32 %s71, 1
        %s371 = smul.addr %s370, 8
        %s372 = scalar_lea.vmem [#allocation2], %s371
        // Predicated region
        $region29: #{tpu_custom_call.1} parent=27 // pred_check
          %p373 = pneg %p81
        $region30: #{tpu_custom_call.1} parent=27 // pred_check_branch
          %375 = sbr.rel (%p373) target = $region32
        $region31: #{tpu_custom_call.1} parent=27 // pred_region
          %s377 = ssub.s32 128, 128
          %378 = vsyncadd %s369, %s377
          %s379 = smul.addr %s16, 128
          %s380 = scalar_lea.hbm %s2, %s379
          %s382 = sshll.u32 %s372, 4
          %s383 = int_to_ptr.vmem [resolvable:$true] %s382
          %385 = dma.vmem_to_hbm [thread:$0]  %s383, 128, %s380, %s369
        $region32: #{tpu_custom_call.1} parent=27 // pred_fallthru
          _
      $region28: #{tpu_custom_call.1} parent=5 // pred_fallthru
        _
      %p386 = scmp.le.s32.totalorder 2, %s11
      // Predicated region
      $region33: #{tpu_custom_call.1} parent=5 // pred_check
        %p387 = pneg %p386
      $region34: #{tpu_custom_call.1} parent=5 // pred_check_branch
        %389 = sbr.rel (%p387) target = $region36
      $region35: #{tpu_custom_call.1} parent=5 // pred_region
        %s390 = ssub.s32 %s11, 2
        // Predicated region
        $region37: #{tpu_custom_call.1} parent=35 // pred_check
          %p391 = pneg %p87
        $region38: #{tpu_custom_call.1} parent=35 // pred_check_branch
          %393 = sbr.rel (%p391) target = $region40
        $region39: #{tpu_custom_call.1} parent=35 // pred_region
          %s394 = sand.u32 %s72, 1
          %s395 = scalar_lea.sflag [#allocation3], %s394
          %s396 = sand.u32 %s72, 1
          %s397 = smul.addr %s396, 8
          %s398 = scalar_lea.vmem [#allocation2], %s397
          %399 = dma.done %s395, 128
        $region40: #{tpu_custom_call.1} parent=35 // pred_fallthru
          _
      $region36: #{tpu_custom_call.1} parent=5 // pred_fallthru
        _
    $region6: #{tpu_custom_call.1} parent=1 // loop_footer
      %s15 = sadd.s32 1, %s11
    $region7: #{tpu_custom_call.1} parent=1 // loop_footer_branch
      %10 = sbr.rel target = $region3
    $region8: #{tpu_custom_call.1} parent=1 // loop_exit
      _
    %400 = vsyncpa [#allocation3], 1
    %s401 = scalar_lea.sflag [#allocation3], 1
    %402 = vsyncpa %s401, 1

</llo_original>
